<compile_context>
chip_gen: v7x
topology: tpu7x:2x2x1
jax: 0.10.0
libtpu: 0.0.40
codegen_flags: <defaults>
</compile_context>

<pallas_src>
import jax
import jax.numpy as jnp
from jax.experimental import pallas as pl
from jax.experimental.pallas import tpu as pltpu

_LANE = 128  # lane width used only for VMEM-footprint rounding


def _round_up(x, m):
    return ((x + m - 1) // m) * m


def _cdiv(a, b):
    return -(-a // b)


# --------------------------------------------------------------------------- #
# Kernel: fused two-matmul body, weights resident in VMEM, batch-tiled grid.
# --------------------------------------------------------------------------- #
def autoencoder_kernel(x_ref, w1_ref, b1_ref, w2_ref, b2_ref, o_ref):
    # x_ref : (bm, d_in)   activations in caller dtype (e.g. f32)
    # w1_ref: (d_in, d_h)  encoder weight (compute dtype)
    # b1_ref: (1, d_h)     encoder bias (f32)
    # w2_ref: (d_h, d_in)  decoder weight (compute dtype)
    # b2_ref: (1, d_in)    decoder bias (f32)
    # o_ref : (bm, d_in)   output (out dtype)
    #
    # Cast the streamed x tile to the MXU compute dtype on the VPU (free)
    # instead of an extra wrapper-side HBM pass.
    x = x_ref[...].astype(w1_ref.dtype)

    # encoder: MXU matmul with f32 accumulation; bias + ReLU in f32 on the VPU
    h = jnp.dot(x, w1_ref[...], preferred_element_type=jnp.float32)
    h = jnp.maximum(h + b1_ref[...], 0.0)

    # decoder: cast back to compute dtype only for the MXU input
    y = jnp.dot(h.astype(w2_ref.dtype), w2_ref[...],
                preferred_element_type=jnp.float32)
    o_ref[...] = jnp.maximum(y + b2_ref[...], 0.0).astype(o_ref.dtype)


# --------------------------------------------------------------------------- #
# One-time parameter preparation (hoisted out of the per-call wrapper).
# --------------------------------------------------------------------------- #
def prepare_params(w1, b1, w2, b2, compute_dtype=jnp.bfloat16):
    """w1: (hidden, input), b1: (hidden,), w2: (input, hidden), b2: (input,)
    in PyTorch layout.  Returns kernel-ready (w1_t, b1_2d, w2_t, b2_2d)."""
    w1_t = jnp.asarray(w1).T.astype(compute_dtype)            # (d_in, d_h)
    w2_t = jnp.asarray(w2).T.astype(compute_dtype)            # (d_h, d_in)
    b1_2d = jnp.asarray(b1, dtype=jnp.float32).reshape(1, -1)  # (1, d_h)
    b2_2d = jnp.asarray(b2, dtype=jnp.float32).reshape(1, -1)  # (1, d_in)
    return w1_t, b1_2d, w2_t, b2_2d


def _vmem_capacity_bytes():
    try:
        return int(pltpu.get_tpu_info().vmem_capacity_bytes)
    except Exception:
        return 64 * 2**20  # conservative fallback (v7x per-TC VMEM)


def _choose_bm(B, d_in, x_itemsize, block_batch, budget_rows):
    """Pick the batch tile: >= ~1 MiB x tile, multiple of 16, fits VMEM,
    >= 2 grid steps when B allows, preferring a tile that divides B."""
    g = 16 if B >= 16 else 8
    target = max(int(block_batch), _cdiv(1 << 20, max(d_in * x_itemsize, 1)))
    target = min(target, budget_rows, _round_up(B, g))
    target = max(g, _round_up(target, g))
    # >= 2 grid steps so ("parallel",) can shard across v7x's 2 TensorCores
    if target >= B and B >= 4 * g:
        target = max(g, _round_up(_cdiv(B, 2), g))
    # prefer a tile that divides B exactly (skips the batch pad + output slice)
    if B % target != 0:
        lo = max(g, target // 4)
        hi = min(target, (B // g) * g)
        for cand in range(hi, lo - 1, -g):
            if cand > 0 and B % cand == 0:
                return cand
    return target


def _call_kernel(x_in, w1_t, b1_2d, w2_t, b2_2d, *, bm, out_dtype,
                 vmem_limit, cost, use_pipeline_mode):
    B_p, d_in = x_in.shape
    d_h = w1_t.shape[1]

    x_kwargs, w_kwargs = {}, {}
    if use_pipeline_mode and hasattr(pl, "Buffered"):
        x_kwargs["pipeline_mode"] = pl.Buffered(3)   # deep-buffer the x stream
        w_kwargs["pipeline_mode"] = pl.Buffered(1)   # constant-index residents

    const_map = lambda i: (0, 0)
    in_specs = [
        pl.BlockSpec((bm, d_in), lambda i: (i, 0), **x_kwargs),
        pl.BlockSpec((d_in, d_h), const_map, **w_kwargs),
        pl.BlockSpec((1, d_h), const_map, **w_kwargs),
        pl.BlockSpec((d_h, d_in), const_map, **w_kwargs),
        pl.BlockSpec((1, d_in), const_map, **w_kwargs),
    ]

    return pl.pallas_call(
        autoencoder_kernel,
        out_shape=jax.ShapeDtypeStruct((B_p, d_in), out_dtype),
        grid_spec=pltpu.PrefetchScalarGridSpec(
            num_scalar_prefetch=0,
            grid=(B_p // bm,),
            in_specs=in_specs,
            out_specs=pl.BlockSpec((bm, d_in), lambda i: (i, 0)),
        ),
        compiler_params=pltpu.CompilerParams(
            dimension_semantics=("parallel",),  # batch tiles shard across TCs
            vmem_limit_bytes=vmem_limit,
        ),
        cost_estimate=cost,
    )(x_in, w1_t, b1_2d, w2_t, b2_2d)


def autoencoder_forward(x, w1_t, b1_2d, w2_t, b2_2d, *, block_batch=256,
                        out_dtype=None):
    """x: (B, input_dim).  (w1_t, b1_2d, w2_t, b2_2d) from prepare_params.
    Returns (B, input_dim) in out_dtype (default: x.dtype)."""
    B, d_in = x.shape
    d_h = w1_t.shape[1]
    assert w1_t.shape == (d_in, d_h) and w2_t.shape == (d_h, d_in)
    out_dtype = x.dtype if out_dtype is None else out_dtype

    x_bytes = jnp.dtype(x.dtype).itemsize
    w_bytes = jnp.dtype(w1_t.dtype).itemsize
    o_bytes = jnp.dtype(out_dtype).itemsize

    # VMEM accounting with lane/sublane-rounded dims (Mosaic pads tiles).
    d_in_r = _round_up(d_in, _LANE)
    d_h_r = _round_up(d_h, _LANE)
    budget = int(_vmem_capacity_bytes() * 0.85)     # headroom for Mosaic scratch
    fixed = (2 * (d_in_r * d_h_r + d_h_r * d_in_r) * w_bytes   # weights (<=2 bufs)
             + 2 * (d_h_r + d_in_r) * 4)                       # biases (f32)
    per_row = (3 * d_in_r * x_bytes        # x stream (<= 3 buffers)
               + 2 * d_in_r * o_bytes      # out stream (2 buffers)
               + d_h_r * (4 + w_bytes))    # hidden f32 + compute-dtype copy
    if fixed + 16 * per_row > budget:
        # TODO(synk): add a hidden-dim reduction grid axis (streamed weight
        # tiles + f32 accumulator) for autoencoders whose weights exceed VMEM.
        raise ValueError("autoencoder weights too large for resident-weight kernel")
    budget_rows = max(16, ((budget - fixed) // per_row) // 16 * 16)

    bm = _choose_bm(B, d_in, x_bytes, block_batch, budget_rows)
    B_p = _round_up(B, bm)
    x_in = x if B_p == B else jnp.pad(x, ((0, B_p - B), (0, 0)))

    est = fixed + bm * per_row
    vmem_limit = int(min(budget, max(est * 5 // 4, 16 * 2**20)))
    cost = pl.CostEstimate(
        flops=4 * B_p * d_in * d_h,
        transcendentals=0,
        bytes_accessed=(B_p * d_in * (x_bytes + o_bytes)
                        + 2 * d_in * d_h * w_bytes + 4 * (d_in + d_h)),
    )

    try:
        out_p = _call_kernel(x_in, w1_t, b1_2d, w2_t, b2_2d, bm=bm,
                             out_dtype=out_dtype, vmem_limit=vmem_limit,
                             cost=cost, use_pipeline_mode=True)
    except Exception:
        # Fallback: plain double-buffered specs (no pipeline_mode hints).
        out_p = _call_kernel(x_in, w1_t, b1_2d, w2_t, b2_2d, bm=bm,
                             out_dtype=out_dtype, vmem_limit=vmem_limit,
                             cost=cost, use_pipeline_mode=False)

    return out_p if B_p == B else out_p[:B]


# --------------------------------------------------------------------------- #
# Reference / init helpers
# --------------------------------------------------------------------------- #
def init_params(key, input_dim, hidden_dim):
    """Deterministic init mimicking nn.Linear's U(-1/sqrt(fan_in), 1/sqrt(fan_in))."""
    k1, k2, k3, k4 = jax.random.split(key, 4)
    bound1 = 1.0 / jnp.sqrt(input_dim)
    bound2 = 1.0 / jnp.sqrt(hidden_dim)
    w1 = jax.random.uniform(k1, (hidden_dim, input_dim), jnp.float32, -bound1, bound1)
    b1 = jax.random.uniform(k2, (hidden_dim,), jnp.float32, -bound1, bound1)
    w2 = jax.random.uniform(k3, (input_dim, hidden_dim), jnp.float32, -bound2, bound2)
    b2 = jax.random.uniform(k4, (input_dim,), jnp.float32, -bound2, bound2)
    return w1, b1, w2, b2


def reference_forward(x, w1, b1, w2, b2, compute_dtype=jnp.float32):
    """Pure-JAX reference mirroring the kernel's (optional) low-precision cast."""
    cd = compute_dtype
    h = jnp.dot(x.astype(cd), w1.T.astype(cd), preferred_element_type=jnp.float32) + b1
    h = jnp.maximum(h, 0.0)
    y = jnp.dot(h.astype(cd), w2.T.astype(cd), preferred_element_type=jnp.float32) + b2
    return jnp.maximum(y, 0.0)


if __name__ == "__main__":
    key = jax.random.PRNGKey(0)
    kx, kp, kx2 = jax.random.split(key, 3)

    # --- small shape consistent with the module -------------------------------
    batch, input_dim, hidden_dim = 8, 64, 32
    x = jax.random.normal(kx, (batch, input_dim), jnp.float32)
    w1, b1, w2, b2 = init_params(kp, input_dim, hidden_dim)

    # f32 compute path: matches PyTorch semantics.
    p_f32 = prepare_params(w1, b1, w2, b2, compute_dtype=jnp.float32)
    out_f32 = jax.block_until_ready(autoencoder_forward(x, *p_f32))
    ref_f32 = reference_forward(x, w1, b1, w2, b2, jnp.float32)
    assert out_f32.shape == (batch, input_dim) and out_f32.dtype == jnp.float32
    assert jnp.allclose(out_f32, ref_f32, atol=1e-4, rtol=1e-4), "f32 mismatch vs reference"

    # bf16 weight path (HBM-bound fast path), f32 output, loose tolerance.
    p_bf16 = prepare_params(w1, b1, w2, b2, compute_dtype=jnp.bfloat16)
    out_bf16 = jax.block_until_ready(autoencoder_forward(x, *p_bf16))
    ref_bf16 = reference_forward(x, w1, b1, w2, b2, jnp.bfloat16)
    assert jnp.allclose(out_bf16, ref_bf16, atol=1e-2, rtol=1e-2), "bf16 mismatch vs reference"

    # Ragged batch + multi-step grid + bf16 output store.
    batch2 = 520
    x2 = jax.random.normal(kx2, (batch2, input_dim), jnp.float32)
    out2 = autoencoder_forward(x2, *p_bf16, block_batch=128, out_dtype=jnp.bfloat16)
    out2 = jax.block_until_ready(out2)
    ref2 = reference_forward(x2, w1, b1, w2, b2, jnp.bfloat16)
    assert out2.shape == (batch2, input_dim) and out2.dtype == jnp.bfloat16
    assert jnp.allclose(out2.astype(jnp.float32), ref2, atol=2e-2, rtol=2e-2), (
        "tiled/ragged mismatch vs reference")

    print("KERNEL_OK")
</pallas_src>

<mosaic_0001>
module attributes {stable_mosaic.version = 11 : i64} {
  func.func @autoencoder_kernel(%arg0: i32, %arg1: memref<8x64xf32, #tpu.memory_space<vmem>>, %arg2: memref<64x32xf32, #tpu.memory_space<vmem>>, %arg3: memref<1x32xf32, #tpu.memory_space<vmem>>, %arg4: memref<32x64xf32, #tpu.memory_space<vmem>>, %arg5: memref<1x64xf32, #tpu.memory_space<vmem>>, %arg6: memref<8x64xf32, #tpu.memory_space<vmem>>) attributes {dimension_semantics = [#tpu.dimension_semantics<parallel>], iteration_bounds = array<i64: 1>, scalar_prefetch = 0 : i64, scratch_operands = 0 : i64, tpu.core_type = #tpu.core_type<tc>, window_params = [{transform_indices = @transform_0, window_bounds = array<i64: 8, 64>}, {pipeline_mode = #tpu.pipeline_mode<synchronous>, transform_indices = @transform_1, window_bounds = array<i64: 64, 32>}, {pipeline_mode = #tpu.pipeline_mode<synchronous>, transform_indices = @transform_2, window_bounds = array<i64: 1, 32>}, {pipeline_mode = #tpu.pipeline_mode<synchronous>, transform_indices = @transform_3, window_bounds = array<i64: 32, 64>}, {pipeline_mode = #tpu.pipeline_mode<synchronous>, transform_indices = @transform_4, window_bounds = array<i64: 1, 64>}, {transform_indices = @transform_5, window_bounds = array<i64: 8, 64>}]} {
    %c0 = arith.constant 0 : index
    %c0_0 = arith.constant 0 : index
    %0 = vector.load %arg1[%c0, %c0_0] : memref<8x64xf32, #tpu.memory_space<vmem>>, vector<8x64xf32>
    %c0_1 = arith.constant 0 : index
    %c0_2 = arith.constant 0 : index
    %1 = vector.load %arg2[%c0_1, %c0_2] : memref<64x32xf32, #tpu.memory_space<vmem>>, vector<64x32xf32>
    %cst = arith.constant dense<0.000000e+00> : vector<8x32xf32>
    %2 = tpu.matmul %0, %1, %cst {dimension_numbers = #tpu.dot_dimension_numbers<[1], [0], [0], [1], [0, 0, 1, 1], [], []>} : vector<8x64xf32>, vector<64x32xf32>, vector<8x32xf32> -> vector<8x32xf32>
    %c0_3 = arith.constant 0 : index
    %c0_4 = arith.constant 0 : index
    %3 = vector.load %arg3[%c0_3, %c0_4] : memref<1x32xf32, #tpu.memory_space<vmem>>, vector<1x32xf32>
    %4 = vector.broadcast %3 : vector<1x32xf32> to vector<8x32xf32>
    %5 = arith.addf %2, %4 : vector<8x32xf32>
    %cst_5 = arith.constant 0.000000e+00 : f32
    %6 = vector.broadcast %cst_5 : f32 to vector<8x32xf32>
    %7 = arith.maximumf %5, %6 : vector<8x32xf32>
    %c0_6 = arith.constant 0 : index
    %c0_7 = arith.constant 0 : index
    %8 = vector.load %arg4[%c0_6, %c0_7] : memref<32x64xf32, #tpu.memory_space<vmem>>, vector<32x64xf32>
    %cst_8 = arith.constant dense<0.000000e+00> : vector<8x64xf32>
    %9 = tpu.matmul %7, %8, %cst_8 {dimension_numbers = #tpu.dot_dimension_numbers<[1], [0], [0], [1], [0, 0, 1, 1], [], []>} : vector<8x32xf32>, vector<32x64xf32>, vector<8x64xf32> -> vector<8x64xf32>
    %c0_9 = arith.constant 0 : index
    %c0_10 = arith.constant 0 : index
    %10 = vector.load %arg5[%c0_9, %c0_10] : memref<1x64xf32, #tpu.memory_space<vmem>>, vector<1x64xf32>
    %11 = vector.broadcast %10 : vector<1x64xf32> to vector<8x64xf32>
    %12 = arith.addf %9, %11 : vector<8x64xf32>
    %cst_11 = arith.constant 0.000000e+00 : f32
    %13 = vector.broadcast %cst_11 : f32 to vector<8x64xf32>
    %14 = arith.maximumf %12, %13 : vector<8x64xf32>
    %c0_12 = arith.constant 0 : index
    %c0_13 = arith.constant 0 : index
    %15 = vector.load %arg6[%c0_12, %c0_13] : memref<8x64xf32, #tpu.memory_space<vmem>>, vector<8x64xf32>
    tpu.vector_store %arg6[%c0_12, %c0_13], %14 {strides = array<i32>} : memref<8x64xf32, #tpu.memory_space<vmem>>, vector<8x64xf32>,
    return
  }
  func.func @transform_0(%arg0: i32) -> (i32, i32) {
    %c0_i32 = arith.constant 0 : i32
    %c0_i32_0 = arith.constant 0 : i32
    return %arg0, %c0_i32 : i32, i32
  }
  func.func @transform_1(%arg0: i32) -> (i32, i32) {
    %c0_i32 = arith.constant 0 : i32
    %c0_i32_0 = arith.constant 0 : i32
    %c0_i32_1 = arith.constant 0 : i32
    return %c0_i32, %c0_i32_0 : i32, i32
  }
  func.func @transform_2(%arg0: i32) -> (i32, i32) {
    %c0_i32 = arith.constant 0 : i32
    %c0_i32_0 = arith.constant 0 : i32
    %c0_i32_1 = arith.constant 0 : i32
    return %c0_i32, %c0_i32_0 : i32, i32
  }
  func.func @transform_3(%arg0: i32) -> (i32, i32) {
    %c0_i32 = arith.constant 0 : i32
    %c0_i32_0 = arith.constant 0 : i32
    %c0_i32_1 = arith.constant 0 : i32
    return %c0_i32, %c0_i32_0 : i32, i32
  }
  func.func @transform_4(%arg0: i32) -> (i32, i32) {
    %c0_i32 = arith.constant 0 : i32
    %c0_i32_0 = arith.constant 0 : i32
    %c0_i32_1 = arith.constant 0 : i32
    return %c0_i32, %c0_i32_0 : i32, i32
  }
  func.func @transform_5(%arg0: i32) -> (i32, i32) {
    %c0_i32 = arith.constant 0 : i32
    %c0_i32_0 = arith.constant 0 : i32
    return %arg0, %c0_i32 : i32, i32
  }
}

</mosaic_0001>

<llo_original>
// kernel: tpu_custom_call.1
$region0: #{tpu_custom_call.1}
  #allocation0 [shape = 'u32[]', space=smem, size = 0x4, offset = 0x4, fixed_abs, tag = 'smem constant byte address 0x4 - core index']
  #allocation1 [shape = 'u32[144,128]{1,0:T(1,128)}', space=vmem, size = 0x12000, scoped, tag = 'internal scratch']
  %s0 = inlined_call_operand.vmem [shape: f32[8,64], index: 0, kind: input, shape index: {}]
  %s1 = inlined_call_operand.vmem [shape: f32[64,32], index: 1, kind: input, shape index: {}]
  %s2 = inlined_call_operand.vmem [shape: f32[1,32], index: 2, kind: input, shape index: {}]
  %s3 = inlined_call_operand.vmem [shape: f32[32,64], index: 3, kind: input, shape index: {}]
  %s4 = inlined_call_operand.vmem [shape: f32[1,64], index: 4, kind: input, shape index: {}]
  %s5 = inlined_call_operand.hbm [shape: f32[8,64], index: 5, kind: output, shape index: {}]
  %s6 = sld [smem:[#allocation0]]
  $region30: #{tpu_custom_call.1} parent=0
    _
  %s8 = ssub.s32 1, %s6
  %s9 = scalar_select 0, %s8, %s6
  $region1: #{tpu_custom_call.1} parent=0
    #allocation2 [shape = 'u8[4096]{0}', space=vmem, size = 0x1000, scoped, tag = 'output window, operand 0, single buffered']
    #allocation3 [shape = 's32[1]{0}', space=sflag, size = 0x4, scoped, tag = 'scoped memory for tpu_custom_call.1']
    %10 = vsyncpa [#allocation3], 0
    // Predicated region
    $region2: #{tpu_custom_call.1} parent=1 // pred_check
      _
    $region3: #{tpu_custom_call.1} parent=1 // pred_check_branch
      %12 = sbr.rel (0) target = $region5
    $region4: #{tpu_custom_call.1} parent=1 // pred_region
      _
    $region5: #{tpu_custom_call.1} parent=1 // pred_fallthru
      _
    // Predicated region
    $region6: #{tpu_custom_call.1} parent=1 // pred_check
      _
    $region7: #{tpu_custom_call.1} parent=1 // pred_check_branch
      %14 = sbr.rel (0) target = $region9
    $region8: #{tpu_custom_call.1} parent=1 // pred_region
      _
    $region9: #{tpu_custom_call.1} parent=1 // pred_fallthru
      _
    // Predicated region
    $region10: #{tpu_custom_call.1} parent=1 // pred_check
      _
    $region11: #{tpu_custom_call.1} parent=1 // pred_check_branch
      %16 = sbr.rel (0) target = $region13
    $region12: #{tpu_custom_call.1} parent=1 // pred_region
      _
    $region13: #{tpu_custom_call.1} parent=1 // pred_fallthru
      _
    // Predicated region
    $region14: #{tpu_custom_call.1} parent=1 // pred_check
      _
    $region15: #{tpu_custom_call.1} parent=1 // pred_check_branch
      %18 = sbr.rel (0) target = $region17
    $region16: #{tpu_custom_call.1} parent=1 // pred_region
      _
    $region17: #{tpu_custom_call.1} parent=1 // pred_fallthru
      _
    // Predicated region
    $region18: #{tpu_custom_call.1} parent=1 // pred_check
      _
    $region19: #{tpu_custom_call.1} parent=1 // pred_check_branch
      %20 = sbr.rel (0) target = $region21
    $region20: #{tpu_custom_call.1} parent=1 // pred_region
      _
    $region21: #{tpu_custom_call.1} parent=1 // pred_fallthru
      _
    %v21 = vld [vmem:[%s0] sm:$0xff]
    %v22 = vld [vmem:[%s1] sm:$0xff]
    %v23 = vld [vmem:[%s1 + $0x8] sm:$0xff]
    %v24 = vld [vmem:[%s1 + $0x10] sm:$0xff]
    %v25 = vld [vmem:[%s1 + $0x18] sm:$0xff]
    %v26 = vld [vmem:[%s1 + $0x20] sm:$0xff]
    %v27 = vld [vmem:[%s1 + $0x28] sm:$0xff]
    %v28 = vld [vmem:[%s1 + $0x30] sm:$0xff]
    %v29 = vld [vmem:[%s1 + $0x38] sm:$0xff]
    %v30 = vld [vmem:[%s2] sm:$0x1]
    %v32 = vlaneseq
    %v33 = vshrl.u32 %v32, 7
    %v34 = vsub.s32 0, %v33
    %v35 = vrot.slane %v30, %v34
    %vm37 = vcmask 523264
    %v39 = vsel %vm37, %v21, 0
    %41 = vmatprep.subr.mxu0 0.0
    %42 = vmatpush1.msra.mxu0 %v22
    %43 = vmatprep.subr.mxu0 0.0
    %44 = vmatpush1.msra.mxu0 %v23
    %45 = vmatprep.subr.mxu0 0.0
    %46 = vmatpush1.msra.mxu0 %v24
    %47 = vmatprep.subr.mxu0 0.0
    %48 = vmatpush1.msra.mxu0 %v25
    %49 = vmatprep.subr.mxu0 0.0
    %50 = vmatpush1.msra.mxu0 %v26
    %51 = vmatprep.subr.mxu0 0.0
    %52 = vmatpush1.msra.mxu0 %v27
    %53 = vmatprep.subr.mxu0 0.0
    %54 = vmatpush1.msra.mxu0 %v28
    %55 = vmatprep.subr.mxu0 0.0
    %56 = vmatpush1.msra.mxu0 %v29
    %57 = vmatprep.subr.mxu0 0.0
    %58 = vmatpush1.msra.mxu0 0.0
    %59 = vmatprep.subr.mxu0 0.0
    %60 = vmatpush1.msra.mxu0 0.0
    %61 = vmatprep.subr.mxu0 0.0
    %62 = vmatpush1.msra.mxu0 0.0
    %63 = vmatprep.subr.mxu0 0.0
    %64 = vmatpush1.msra.mxu0 0.0
    %65 = vmatprep.subr.mxu0 0.0
    %66 = vmatpush1.msra.mxu0 0.0
    %67 = vmatprep.subr.mxu0 0.0
    %68 = vmatpush1.msra.mxu0 0.0
    %69 = vmatprep.subr.mxu0 0.0
    %70 = vmatpush1.msra.mxu0 0.0
    %71 = vmatprep.subr.mxu0 0.0
    %72 = vmatpush1.msra.mxu0 0.0
    %73 = vmatprep.subr.mxu0 0.0
    %74 = vmatpush1.msra.mxu0 0.0
    %75 = vmatprep.subr.mxu0 0.0
    %76 = vmatpush1.msra.mxu0 0.0
    %77 = vmatprep.subr.mxu0 0.0
    %78 = vmatpush1.msra.mxu0 0.0
    %79 = vmatprep.subr.mxu0 0.0
    %80 = vmatpush1.msra.mxu0 0.0
    %81 = vmatprep.subr.mxu0 0.0
    %82 = vmatpush1.msra.mxu0 0.0
    %83 = vmatprep.subr.mxu0 0.0
    %84 = vmatpush1.msra.mxu0 0.0
    %85 = vmatprep.subr.mxu0 0.0
    %86 = vmatpush1.msra.mxu0 0.0
    %87 = vmatprep.subr.mxu0 0.0
    %88 = vmatpush1.msra.mxu0 0.0
    %89 = vmatprep.subr.mxu0 0.0
    %90 = vmatpush1.msra.mxu0 0.0
    %91 = vmatprep.subr.mxu0 0.0
    %92 = vmatpush1.msra.mxu0 0.0
    %93 = vmatprep.subr.mxu0 0.0
    %94 = vmatpush1.msra.mxu0 0.0
    %95 = vmatprep.subr.mxu0 0.0
    %96 = vmatpush1.msra.mxu0 0.0
    %97 = vmatprep.subr.mxu0 0.0
    %98 = vmatpush1.msra.mxu0 0.0
    %99 = vmatprep.subr.mxu0 0.0
    %100 = vmatpush1.msra.mxu0 0.0
    %101 = vmatprep.subr.mxu0 0.0
    %102 = vmatpush1.msra.mxu0 0.0
    %103 = vmatprep.subr.mxu0 0.0
    %104 = vmatpush1.msra.mxu0 0.0
    %105 = vmatprep.mubr.f32.mxu0 0.0
    %106 = vmatmul.mubr.f32.gmra.mrb[0].mxu0 %v39
    %v107 = vpop.f32.mrb[0].mxu0
    %v108 = vadd.f32 %v35, %v107
    %v109 = vpop.f32.mrb[0].mxu0
    %110 = vdwg.mxu0
    %v111 = vmax.f32 %v108, 0.0
    %v112 = vld [vmem:[%s3] sm:$0xff]
    %v113 = vld [vmem:[%s3 + $0x8] sm:$0xff]
    %v114 = vld [vmem:[%s3 + $0x10] sm:$0xff]
    %v115 = vld [vmem:[%s3 + $0x18] sm:$0xff]
    %v116 = vld [vmem:[%s4] sm:$0x1]
    %v118 = vlaneseq
    %v119 = vshrl.u32 %v118, 7
    %v120 = vsub.s32 0, %v119
    %v121 = vrot.slane %v116, %v120
    %vm123 = vcmask 261120
    %v125 = vsel %vm123, %v111, 0
    %127 = vmatprep.subr.mxu0 0.0
    %128 = vmatpush1.msra.mxu0 %v112
    %129 = vmatprep.subr.mxu0 0.0
    %130 = vmatpush1.msra.mxu0 %v113
    %131 = vmatprep.subr.mxu0 0.0
    %132 = vmatpush1.msra.mxu0 %v114
    %133 = vmatprep.subr.mxu0 0.0
    %134 = vmatpush1.msra.mxu0 %v115
    %135 = vmatprep.subr.mxu0 0.0
    %136 = vmatpush1.msra.mxu0 0.0
    %137 = vmatprep.subr.mxu0 0.0
    %138 = vmatpush1.msra.mxu0 0.0
    %139 = vmatprep.subr.mxu0 0.0
    %140 = vmatpush1.msra.mxu0 0.0
    %141 = vmatprep.subr.mxu0 0.0
    %142 = vmatpush1.msra.mxu0 0.0
    %143 = vmatprep.subr.mxu0 0.0
    %144 = vmatpush1.msra.mxu0 0.0
    %145 = vmatprep.subr.mxu0 0.0
    %146 = vmatpush1.msra.mxu0 0.0
    %147 = vmatprep.subr.mxu0 0.0
    %148 = vmatpush1.msra.mxu0 0.0
    %149 = vmatprep.subr.mxu0 0.0
    %150 = vmatpush1.msra.mxu0 0.0
    %151 = vmatprep.subr.mxu0 0.0
    %152 = vmatpush1.msra.mxu0 0.0
    %153 = vmatprep.subr.mxu0 0.0
    %154 = vmatpush1.msra.mxu0 0.0
    %155 = vmatprep.subr.mxu0 0.0
    %156 = vmatpush1.msra.mxu0 0.0
    %157 = vmatprep.subr.mxu0 0.0
    %158 = vmatpush1.msra.mxu0 0.0
    %159 = vmatprep.subr.mxu0 0.0
    %160 = vmatpush1.msra.mxu0 0.0
    %161 = vmatprep.subr.mxu0 0.0
    %162 = vmatpush1.msra.mxu0 0.0
    %163 = vmatprep.subr.mxu0 0.0
    %164 = vmatpush1.msra.mxu0 0.0
    %165 = vmatprep.subr.mxu0 0.0
    %166 = vmatpush1.msra.mxu0 0.0
    %167 = vmatprep.subr.mxu0 0.0
    %168 = vmatpush1.msra.mxu0 0.0
    %169 = vmatprep.subr.mxu0 0.0
    %170 = vmatpush1.msra.mxu0 0.0
    %171 = vmatprep.subr.mxu0 0.0
    %172 = vmatpush1.msra.mxu0 0.0
    %173 = vmatprep.subr.mxu0 0.0
    %174 = vmatpush1.msra.mxu0 0.0
    %175 = vmatprep.subr.mxu0 0.0
    %176 = vmatpush1.msra.mxu0 0.0
    %177 = vmatprep.subr.mxu0 0.0
    %178 = vmatpush1.msra.mxu0 0.0
    %179 = vmatprep.subr.mxu0 0.0
    %180 = vmatpush1.msra.mxu0 0.0
    %181 = vmatprep.subr.mxu0 0.0
    %182 = vmatpush1.msra.mxu0 0.0
    %183 = vmatprep.subr.mxu0 0.0
    %184 = vmatpush1.msra.mxu0 0.0
    %185 = vmatprep.subr.mxu0 0.0
    %186 = vmatpush1.msra.mxu0 0.0
    %187 = vmatprep.subr.mxu0 0.0
    %188 = vmatpush1.msra.mxu0 0.0
    %189 = vmatprep.subr.mxu0 0.0
    %190 = vmatpush1.msra.mxu0 0.0
    %191 = vmatprep.mubr.f32.mxu0 0.0
    %192 = vmatmul.mubr.f32.gmra.mrb[0].mxu0 %v125
    %v193 = vpop.f32.mrb[0].mxu0
    %v194 = vadd.f32 %v121, %v193
    %v195 = vpop.f32.mrb[0].mxu0
    %196 = vdwg.mxu0
    %v197 = vmax.f32 %v194, 0.0
    %198 = vst.msk [vmem:[#allocation2] sm:$0xff] %vm37, %v197
    // Predicated region
    $region22: #{tpu_custom_call.1} parent=1 // pred_check
      _
    $region23: #{tpu_custom_call.1} parent=1 // pred_check_branch
      %200 = sbr.rel (0) target = $region25
    $region24: #{tpu_custom_call.1} parent=1 // pred_region
      %s202 = ssub.s32 128, 128
      %203 = vsyncadd [#allocation3], %s202
      %s205 = sshll.u32 [#allocation2], 4
      %s206 = int_to_ptr.vmem [resolvable:$true] %s205
      %208 = dma.vmem_to_hbm [thread:$0]  %s206, 128, %s5, [#allocation3]
    $region25: #{tpu_custom_call.1} parent=1 // pred_fallthru
      _
    // Predicated region
    $region26: #{tpu_custom_call.1} parent=1 // pred_check
      _
    $region27: #{tpu_custom_call.1} parent=1 // pred_check_branch
      %210 = sbr.rel (0) target = $region29
    $region28: #{tpu_custom_call.1} parent=1 // pred_region
      %211 = dma.done [#allocation3], 128
    $region29: #{tpu_custom_call.1} parent=1 // pred_fallthru
      _
    %212 = vsyncpa [#allocation3], 1

</llo_original>
